<compile_context>
chip_gen: v7x
topology: tpu7x:2x2x1
jax: 0.10.0
libtpu: 0.0.40
codegen_flags: <defaults>
</compile_context>

<pallas_src>
import jax
import jax.numpy as jnp
from jax import lax
from jax.experimental import pallas as pl
from jax.experimental.pallas import tpu as pltpu


def _seg_emb_kernel(ids_ref, emb_ref, out_ref):
    """One grid step: gather rows of the embedding table.

    ids_ref: VMEM (tr, 128) int32, lane-dense packed segment ids
    emb_ref: VMEM (V, D)    full embedding table (resident, constant index_map)
    out_ref: VMEM (rows, D) output rows, rows <= tr * 128
    """
    V, D = emb_ref.shape
    tr, lanes = ids_ref.shape
    rows = out_ref.shape[0]

    ids = jnp.clip(ids_ref[...], 0, V - 1)       # (tr, 128); clamp OOR ids
    ids3 = ids[..., None]                         # (tr, 128, 1): lane -> sublane

    if V <= 8:
        # Tiny vocabulary (BERT num_segments ~ 2-4): VPU select chain, no MXU.
        acc = jnp.broadcast_to(emb_ref[0, :][None, None, :], (tr, lanes, D))
        for v in range(1, V):                     # static unroll, V is small
            acc = jnp.where(ids3 == v, emb_ref[v, :][None, None, :], acc)
        full = acc.reshape(tr * lanes, D)
    else:
        # General path: one-hot matmul on the MXU, one-hot built in the
        # table's dtype (exact), accumulate in f32.
        one_hot = (ids3 == lax.broadcasted_iota(jnp.int32, (tr, lanes, V), 2)
                   ).astype(emb_ref.dtype)
        full = jnp.dot(one_hot.reshape(tr * lanes, V), emb_ref[...],
                       preferred_element_type=jnp.float32)

    # rows == tr*lanes on full blocks; static prefix slice otherwise (grid==1).
    out_ref[...] = full[:rows].astype(out_ref.dtype)


def _round_up(x, m):
    return -(-x // m) * m


def segment_embedding(ids, emb_table, *, target_block_bytes=4 * 1024 * 1024):
    """Embedding lookup: ids (B, S) int -> (B, S, D) in emb_table.dtype."""
    B, S = ids.shape
    V, D = emb_table.shape
    N = B * S
    itemsize = jnp.dtype(emb_table.dtype).itemsize

    LANES = 128
    # ---- lane-dense ids packing: (n_packs, 128) int32 ---------------------
    n_pad = _round_up(N, LANES)
    ids_flat = ids.reshape(N).astype(jnp.int32)
    if n_pad != N:
        ids_flat = jnp.pad(ids_flat, (0, n_pad - N))   # pad with id 0 (valid)
    n_packs = n_pad // LANES
    ids_packed = ids_flat.reshape(n_packs, LANES)

    # ---- tile sizing: ~target_block_bytes of OUTPUT per grid step ---------
    bytes_per_pack = LANES * D * itemsize
    desired = max(1, target_block_bytes // bytes_per_pack)   # in 128-row packs
    desired = max(8, _round_up(desired, 8))                  # sublane multiple
    if n_packs >= 16:
        # Keep the grid >= 2 so the "parallel" axis can shard across both
        # TensorCores on v7x.
        desired = min(desired, _round_up(-(-n_packs // 2), 8))
    tile_rows = n_packs if desired >= n_packs else desired   # full-dim or x8
    tile = tile_rows * LANES
    grid = -(-N // tile)
    # Output block never exceeds the array: exact (N, D) when a single block.
    out_block_rows = N if grid == 1 else tile

    # ---- explicit VMEM budget (double-buffered blocks + resident table) ---
    out_block_bytes = out_block_rows * D * itemsize
    ids_block_bytes = tile_rows * LANES * 4
    table_bytes = V * D * itemsize
    vmem_limit = int(min(2 * (out_block_bytes + ids_block_bytes + table_bytes)
                         + (4 << 20), 100 << 20))

    cost = pl.CostEstimate(
        flops=0 if V <= 8 else 2 * N * V * D,    # select path uses no MXU
        transcendentals=0,
        bytes_accessed=N * D * itemsize          # output write (true floor)
        + N * 4                                  # ids read
        + table_bytes,                           # table read (once)
    )

    out = pl.pallas_call(
        _seg_emb_kernel,
        out_shape=jax.ShapeDtypeStruct((N, D), emb_table.dtype),
        grid=(grid,),
        in_specs=[
            pl.BlockSpec((tile_rows, LANES), lambda i: (i, 0)),  # ids, dense
            pl.BlockSpec((V, D), lambda i: (0, 0)),              # table
        ],
        out_specs=pl.BlockSpec((out_block_rows, D), lambda i: (i, 0)),
        compiler_params=pltpu.CompilerParams(
            dimension_semantics=("parallel",),
            vmem_limit_bytes=vmem_limit,
        ),
        cost_estimate=cost,
    )(ids_packed, emb_table)

    return out.reshape(B, S, D)


if __name__ == "__main__":
    # Deterministic "module init": nn.Embedding weights ~ N(0, 1).
    num_segments = 4
    d_model = 128
    batch, seq = 2, 64

    key = jax.random.PRNGKey(0)
    k_w, k_ids = jax.random.split(key)
    emb_table = jax.random.normal(k_w, (num_segments, d_model), dtype=jnp.float32)
    ids = jax.random.randint(k_ids, (batch, seq), 0, num_segments, dtype=jnp.int32)

    out = segment_embedding(ids, emb_table)
    out = jax.block_until_ready(out)

    # Reference check (plain JAX gather == torch nn.Embedding forward).
    ref = jnp.take(emb_table, ids, axis=0)
    assert out.shape == (batch, seq, d_model)
    assert out.dtype == emb_table.dtype
    assert jnp.allclose(out, ref), "mismatch vs reference embedding lookup"

    print("KERNEL_OK")
</pallas_src>

<mosaic_0001>
module attributes {stable_mosaic.version = 11 : i64} {
  func.func @_seg_emb_kernel(%arg0: i32, %arg1: memref<1x128xi32, #tpu.memory_space<vmem>>, %arg2: memref<4x128xf32, #tpu.memory_space<vmem>>, %arg3: memref<128x128xf32, #tpu.memory_space<vmem>>) attributes {dimension_semantics = [#tpu.dimension_semantics<parallel>], iteration_bounds = array<i64: 1>, scalar_prefetch = 0 : i64, scratch_operands = 0 : i64, tpu.core_type = #tpu.core_type<tc>, window_params = [{transform_indices = @transform_0, window_bounds = array<i64: 1, 128>}, {pipeline_mode = #tpu.pipeline_mode<synchronous>, transform_indices = @transform_1, window_bounds = array<i64: 4, 128>}, {transform_indices = @transform_2, window_bounds = array<i64: 128, 128>}]} {
    %c0 = arith.constant 0 : index
    %c0_0 = arith.constant 0 : index
    %0 = vector.load %arg1[%c0, %c0_0] : memref<1x128xi32, #tpu.memory_space<vmem>>, vector<1x128xi32>
    %c0_i32 = arith.constant 0 : i32
    %c3_i32 = arith.constant 3 : i32
    %1 = vector.broadcast %c0_i32 : i32 to vector<1x128xi32>
    %2 = arith.maxsi %1, %0 : vector<1x128xi32>
    %3 = vector.broadcast %c3_i32 : i32 to vector<1x128xi32>
    %4 = arith.minsi %3, %2 : vector<1x128xi32>
    %5 = vector.shape_cast %4 : vector<1x128xi32> to vector<1x128x1xi32>
    %c0_1 = arith.constant 0 : index
    %c0_2 = arith.constant 0 : index
    %6 = vector.load %arg2[%c0_1, %c0_2] : memref<4x128xf32, #tpu.memory_space<vmem>>, vector<1x128xf32>
    %7 = vector.shape_cast %6 : vector<1x128xf32> to vector<128xf32>
    %8 = vector.shape_cast %7 : vector<128xf32> to vector<1x1x128xf32>
    %9 = vector.shape_cast %8 : vector<1x1x128xf32> to vector<1x1x128xf32>
    %10 = vector.broadcast %9 : vector<1x1x128xf32> to vector<1x128x128xf32>
    %c1_i32 = arith.constant 1 : i32
    %11 = vector.broadcast %c1_i32 : i32 to vector<1x128x1xi32>
    %12 = arith.cmpi eq, %5, %11 : vector<1x128x1xi32>
    %c1 = arith.constant 1 : index
    %c0_3 = arith.constant 0 : index
    %13 = vector.load %arg2[%c1, %c0_3] : memref<4x128xf32, #tpu.memory_space<vmem>>, vector<1x128xf32>
    %14 = vector.shape_cast %13 : vector<1x128xf32> to vector<128xf32>
    %15 = vector.shape_cast %14 : vector<128xf32> to vector<1x1x128xf32>
    %16 = vector.shape_cast %12 : vector<1x128x1xi1> to vector<1x128x1xi1>
    %17 = vector.broadcast %16 : vector<1x128x1xi1> to vector<1x128x128xi1>
    %18 = vector.shape_cast %15 : vector<1x1x128xf32> to vector<1x1x128xf32>
    %19 = vector.broadcast %18 : vector<1x1x128xf32> to vector<1x128x128xf32>
    %20 = arith.select %17, %19, %10 : vector<1x128x128xi1>, vector<1x128x128xf32>
    %c2_i32 = arith.constant 2 : i32
    %21 = vector.broadcast %c2_i32 : i32 to vector<1x128x1xi32>
    %22 = arith.cmpi eq, %5, %21 : vector<1x128x1xi32>
    %c2 = arith.constant 2 : index
    %c0_4 = arith.constant 0 : index
    %23 = vector.load %arg2[%c2, %c0_4] : memref<4x128xf32, #tpu.memory_space<vmem>>, vector<1x128xf32>
    %24 = vector.shape_cast %23 : vector<1x128xf32> to vector<128xf32>
    %25 = vector.shape_cast %24 : vector<128xf32> to vector<1x1x128xf32>
    %26 = vector.shape_cast %22 : vector<1x128x1xi1> to vector<1x128x1xi1>
    %27 = vector.broadcast %26 : vector<1x128x1xi1> to vector<1x128x128xi1>
    %28 = vector.shape_cast %25 : vector<1x1x128xf32> to vector<1x1x128xf32>
    %29 = vector.broadcast %28 : vector<1x1x128xf32> to vector<1x128x128xf32>
    %30 = arith.select %27, %29, %20 : vector<1x128x128xi1>, vector<1x128x128xf32>
    %c3_i32_5 = arith.constant 3 : i32
    %31 = vector.broadcast %c3_i32_5 : i32 to vector<1x128x1xi32>
    %32 = arith.cmpi eq, %5, %31 : vector<1x128x1xi32>
    %c3 = arith.constant 3 : index
    %c0_6 = arith.constant 0 : index
    %33 = vector.load %arg2[%c3, %c0_6] : memref<4x128xf32, #tpu.memory_space<vmem>>, vector<1x128xf32>
    %34 = vector.shape_cast %33 : vector<1x128xf32> to vector<128xf32>
    %35 = vector.shape_cast %34 : vector<128xf32> to vector<1x1x128xf32>
    %36 = vector.shape_cast %32 : vector<1x128x1xi1> to vector<1x128x1xi1>
    %37 = vector.broadcast %36 : vector<1x128x1xi1> to vector<1x128x128xi1>
    %38 = vector.shape_cast %35 : vector<1x1x128xf32> to vector<1x1x128xf32>
    %39 = vector.broadcast %38 : vector<1x1x128xf32> to vector<1x128x128xf32>
    %40 = arith.select %37, %39, %30 : vector<1x128x128xi1>, vector<1x128x128xf32>
    %41 = vector.shape_cast %40 : vector<1x128x128xf32> to vector<128x128xf32>
    %c0_7 = arith.constant 0 : index
    %c0_8 = arith.constant 0 : index
    %42 = vector.load %arg3[%c0_7, %c0_8] : memref<128x128xf32, #tpu.memory_space<vmem>>, vector<128x128xf32>
    tpu.vector_store %arg3[%c0_7, %c0_8], %41 {strides = array<i32>} : memref<128x128xf32, #tpu.memory_space<vmem>>, vector<128x128xf32>,
    return
  }
  func.func @transform_0(%arg0: i32) -> (i32, i32) {
    %c0_i32 = arith.constant 0 : i32
    %c0_i32_0 = arith.constant 0 : i32
    return %arg0, %c0_i32 : i32, i32
  }
  func.func @transform_1(%arg0: i32) -> (i32, i32) {
    %c0_i32 = arith.constant 0 : i32
    %c0_i32_0 = arith.constant 0 : i32
    %c0_i32_1 = arith.constant 0 : i32
    return %c0_i32, %c0_i32_0 : i32, i32
  }
  func.func @transform_2(%arg0: i32) -> (i32, i32) {
    %c0_i32 = arith.constant 0 : i32
    %c0_i32_0 = arith.constant 0 : i32
    return %arg0, %c0_i32 : i32, i32
  }
}

</mosaic_0001>

<llo_original>
// kernel: tpu_custom_call.1
$region0: #{tpu_custom_call.1}
  #allocation0 [shape = 'u32[]', space=smem, size = 0x4, offset = 0x4, fixed_abs, tag = 'smem constant byte address 0x4 - core index']
  #allocation1 [shape = 'u32[144,128]{1,0:T(1,128)}', space=vmem, size = 0x12000, scoped, tag = 'internal scratch']
  %s0 = inlined_call_operand.hbm [shape: s32[1,128], index: 0, kind: input, shape index: {}]
  %s1 = inlined_call_operand.hbm [shape: f32[4,128], index: 1, kind: input, shape index: {}]
  %s2 = inlined_call_operand.hbm [shape: f32[128,128], index: 2, kind: output, shape index: {}]
  %s3 = sld [smem:[#allocation0]]
  $region26: #{tpu_custom_call.1} parent=0
    _
  %s5 = ssub.s32 1, %s3
  %s6 = scalar_select 0, %s5, %s3
  $region1: #{tpu_custom_call.1} parent=0
    #allocation2 [shape = 'u8[512]{0}', space=vmem, size = 0x400, scoped, tag = 'input window, operand 0, single buffered']
    #allocation3 [shape = 's32[1]{0}', space=sflag, size = 0x4, scoped, tag = 'scoped memory for tpu_custom_call.1']
    #allocation4 [shape = 's32[1]{0}', space=sflag, size = 0x4, scoped, tag = 'scoped memory for tpu_custom_call.1']
    #allocation5 [shape = 'u8[2048]{0}', space=vmem, size = 0x800, scoped, tag = 'input window, operand 1, single buffered']
    #allocation6 [shape = 's32[1]{0}', space=sflag, size = 0x4, scoped, tag = 'scoped memory for tpu_custom_call.1']
    #allocation7 [shape = 'u8[65536]{0}', space=vmem, size = 0x10000, scoped, tag = 'output window, operand 0, single buffered']
    %7 = vsyncpa [#allocation3], 0
    %8 = vsyncpa [#allocation6], 0
    %9 = vsyncpa [#allocation4], 0
    // Predicated region
    $region2: #{tpu_custom_call.1} parent=1 // pred_check
      _
    $region3: #{tpu_custom_call.1} parent=1 // pred_check_branch
      %11 = sbr.rel (0) target = $region5
    $region4: #{tpu_custom_call.1} parent=1 // pred_region
      %s13 = ssub.s32 16, 16
      %14 = vsyncadd [#allocation3], %s13
      %s16 = sshll.u32 [#allocation2], 4
      %s17 = int_to_ptr.vmem [resolvable:$true] %s16
      %19 = dma.hbm_to_vmem [thread:$0]  %s0, 16, %s17, [#allocation3]
    $region5: #{tpu_custom_call.1} parent=1 // pred_fallthru
      _
    // Predicated region
    $region6: #{tpu_custom_call.1} parent=1 // pred_check
      _
    $region7: #{tpu_custom_call.1} parent=1 // pred_check_branch
      %21 = sbr.rel (0) target = $region9
    $region8: #{tpu_custom_call.1} parent=1 // pred_region
      %s23 = ssub.s32 64, 64
      %24 = vsyncadd [#allocation6], %s23
      %s26 = sshll.u32 [#allocation5], 4
      %s27 = int_to_ptr.vmem [resolvable:$true] %s26
      %29 = dma.hbm_to_vmem [thread:$0]  %s1, 64, %s27, [#allocation6]
    $region9: #{tpu_custom_call.1} parent=1 // pred_fallthru
      _
    // Predicated region
    $region10: #{tpu_custom_call.1} parent=1 // pred_check
      _
    $region11: #{tpu_custom_call.1} parent=1 // pred_check_branch
      %31 = sbr.rel (0) target = $region13
    $region12: #{tpu_custom_call.1} parent=1 // pred_region
      %32 = dma.done [#allocation3], 16
    $region13: #{tpu_custom_call.1} parent=1 // pred_fallthru
      _
    // Predicated region
    $region14: #{tpu_custom_call.1} parent=1 // pred_check
      _
    $region15: #{tpu_custom_call.1} parent=1 // pred_check_branch
      %34 = sbr.rel (0) target = $region17
    $region16: #{tpu_custom_call.1} parent=1 // pred_region
      %35 = dma.done [#allocation6], 64
    $region17: #{tpu_custom_call.1} parent=1 // pred_fallthru
      _
    %v36 = vld [vmem:[#allocation2] sm:$0x1]
    %vm37 = vcmp.gt.s32.totalorder %v36, 0
    %v38 = vsel %vm37, %v36, 0
    %vm39 = vcmp.lt.s32.totalorder %v38, 3
    %v40 = vsel %vm39, %v38, 3
    %v41 = vlaneseq
    %v42 = vshrl.u32 %v41, 7
    %v43 = vsub.s32 0, %v42
    %v44 = vrot.slane %v40, %v43
    %46 = vbcast.lane.b32.xlu0 %v44, 256
    %v47 = vpop.permute.xlu0 %46
    %s49 = sor.u32 256, 8
    %50 = vbcast.lane.b32.xlu0 %v44, %s49
    %v51 = vpop.permute.xlu0 %50
    %s53 = sor.u32 256, 16
    %54 = vbcast.lane.b32.xlu0 %v44, %s53
    %v55 = vpop.permute.xlu0 %54
    %s57 = sor.u32 256, 24
    %58 = vbcast.lane.b32.xlu0 %v44, %s57
    %v59 = vpop.permute.xlu0 %58
    %s61 = sor.u32 256, 32
    %62 = vbcast.lane.b32.xlu0 %v44, %s61
    %v63 = vpop.permute.xlu0 %62
    %s65 = sor.u32 256, 40
    %66 = vbcast.lane.b32.xlu0 %v44, %s65
    %v67 = vpop.permute.xlu0 %66
    %s69 = sor.u32 256, 48
    %70 = vbcast.lane.b32.xlu0 %v44, %s69
    %v71 = vpop.permute.xlu0 %70
    %s73 = sor.u32 256, 56
    %74 = vbcast.lane.b32.xlu0 %v44, %s73
    %v75 = vpop.permute.xlu0 %74
    %s77 = sor.u32 256, 64
    %78 = vbcast.lane.b32.xlu0 %v44, %s77
    %v79 = vpop.permute.xlu0 %78
    %s81 = sor.u32 256, 72
    %82 = vbcast.lane.b32.xlu0 %v44, %s81
    %v83 = vpop.permute.xlu0 %82
    %s85 = sor.u32 256, 80
    %86 = vbcast.lane.b32.xlu0 %v44, %s85
    %v87 = vpop.permute.xlu0 %86
    %s89 = sor.u32 256, 88
    %90 = vbcast.lane.b32.xlu0 %v44, %s89
    %v91 = vpop.permute.xlu0 %90
    %s93 = sor.u32 256, 96
    %94 = vbcast.lane.b32.xlu0 %v44, %s93
    %v95 = vpop.permute.xlu0 %94
    %s97 = sor.u32 256, 104
    %98 = vbcast.lane.b32.xlu0 %v44, %s97
    %v99 = vpop.permute.xlu0 %98
    %s101 = sor.u32 256, 112
    %102 = vbcast.lane.b32.xlu0 %v44, %s101
    %v103 = vpop.permute.xlu0 %102
    %s105 = sor.u32 256, 120
    %106 = vbcast.lane.b32.xlu0 %v44, %s105
    %v107 = vpop.permute.xlu0 %106
    %v108 = vld [vmem:[#allocation5] sm:$0x1]
    %v109 = vlaneseq
    %v110 = vshrl.u32 %v109, 7
    %v111 = vsub.s32 0, %v110
    %v112 = vrot.slane %v108, %v111
    %vm113 = vcmp.eq.s32.totalorder %v47, 1
    %vm114 = vcmp.eq.s32.totalorder %v51, 1
    %vm115 = vcmp.eq.s32.totalorder %v55, 1
    %vm116 = vcmp.eq.s32.totalorder %v59, 1
    %vm117 = vcmp.eq.s32.totalorder %v63, 1
    %vm118 = vcmp.eq.s32.totalorder %v67, 1
    %vm119 = vcmp.eq.s32.totalorder %v71, 1
    %vm120 = vcmp.eq.s32.totalorder %v75, 1
    %vm121 = vcmp.eq.s32.totalorder %v79, 1
    %vm122 = vcmp.eq.s32.totalorder %v83, 1
    %vm123 = vcmp.eq.s32.totalorder %v87, 1
    %vm124 = vcmp.eq.s32.totalorder %v91, 1
    %vm125 = vcmp.eq.s32.totalorder %v95, 1
    %vm126 = vcmp.eq.s32.totalorder %v99, 1
    %vm127 = vcmp.eq.s32.totalorder %v103, 1
    %vm128 = vcmp.eq.s32.totalorder %v107, 1
    %v129 = vld [vmem:[#allocation5 + $0x1] sm:$0x1]
    %v130 = vsel %vm113, 1, 0
    %v131 = vsel %vm114, 1, 0
    %v132 = vsel %vm115, 1, 0
    %v133 = vsel %vm116, 1, 0
    %v134 = vsel %vm117, 1, 0
    %v135 = vsel %vm118, 1, 0
    %v136 = vsel %vm119, 1, 0
    %v137 = vsel %vm120, 1, 0
    %v138 = vsel %vm121, 1, 0
    %v139 = vsel %vm122, 1, 0
    %v140 = vsel %vm123, 1, 0
    %v141 = vsel %vm124, 1, 0
    %v142 = vsel %vm125, 1, 0
    %v143 = vsel %vm126, 1, 0
    %v144 = vsel %vm127, 1, 0
    %v145 = vsel %vm128, 1, 0
    %vm146 = vcmp.eq.s32.totalorder %v130, 1
    %vm147 = vcmp.eq.s32.totalorder %v131, 1
    %vm148 = vcmp.eq.s32.totalorder %v132, 1
    %vm149 = vcmp.eq.s32.totalorder %v133, 1
    %vm150 = vcmp.eq.s32.totalorder %v134, 1
    %vm151 = vcmp.eq.s32.totalorder %v135, 1
    %vm152 = vcmp.eq.s32.totalorder %v136, 1
    %vm153 = vcmp.eq.s32.totalorder %v137, 1
    %vm154 = vcmp.eq.s32.totalorder %v138, 1
    %vm155 = vcmp.eq.s32.totalorder %v139, 1
    %vm156 = vcmp.eq.s32.totalorder %v140, 1
    %vm157 = vcmp.eq.s32.totalorder %v141, 1
    %vm158 = vcmp.eq.s32.totalorder %v142, 1
    %vm159 = vcmp.eq.s32.totalorder %v143, 1
    %vm160 = vcmp.eq.s32.totalorder %v144, 1
    %vm161 = vcmp.eq.s32.totalorder %v145, 1
    %v162 = vlaneseq
    %v163 = vshrl.u32 %v162, 7
    %v164 = vsub.s32 0, %v163
    %v165 = vrot.slane %v129, %v164
    %v166 = vsel %vm146, %v165, %v112
    %v167 = vsel %vm147, %v165, %v112
    %v168 = vsel %vm148, %v165, %v112
    %v169 = vsel %vm149, %v165, %v112
    %v170 = vsel %vm150, %v165, %v112
    %v171 = vsel %vm151, %v165, %v112
    %v172 = vsel %vm152, %v165, %v112
    %v173 = vsel %vm153, %v165, %v112
    %v174 = vsel %vm154, %v165, %v112
    %v175 = vsel %vm155, %v165, %v112
    %v176 = vsel %vm156, %v165, %v112
    %v177 = vsel %vm157, %v165, %v112
    %v178 = vsel %vm158, %v165, %v112
    %v179 = vsel %vm159, %v165, %v112
    %v180 = vsel %vm160, %v165, %v112
    %v181 = vsel %vm161, %v165, %v112
    %vm182 = vcmp.eq.s32.totalorder %v47, 2
    %vm183 = vcmp.eq.s32.totalorder %v51, 2
    %vm184 = vcmp.eq.s32.totalorder %v55, 2
    %vm185 = vcmp.eq.s32.totalorder %v59, 2
    %vm186 = vcmp.eq.s32.totalorder %v63, 2
    %vm187 = vcmp.eq.s32.totalorder %v67, 2
    %vm188 = vcmp.eq.s32.totalorder %v71, 2
    %vm189 = vcmp.eq.s32.totalorder %v75, 2
    %vm190 = vcmp.eq.s32.totalorder %v79, 2
    %vm191 = vcmp.eq.s32.totalorder %v83, 2
    %vm192 = vcmp.eq.s32.totalorder %v87, 2
    %vm193 = vcmp.eq.s32.totalorder %v91, 2
    %vm194 = vcmp.eq.s32.totalorder %v95, 2
    %vm195 = vcmp.eq.s32.totalorder %v99, 2
    %vm196 = vcmp.eq.s32.totalorder %v103, 2
    %vm197 = vcmp.eq.s32.totalorder %v107, 2
    %v198 = vld [vmem:[#allocation5 + $0x2] sm:$0x1]
    %v199 = vsel %vm182, 1, 0
    %v200 = vsel %vm183, 1, 0
    %v201 = vsel %vm184, 1, 0
    %v202 = vsel %vm185, 1, 0
    %v203 = vsel %vm186, 1, 0
    %v204 = vsel %vm187, 1, 0
    %v205 = vsel %vm188, 1, 0
    %v206 = vsel %vm189, 1, 0
    %v207 = vsel %vm190, 1, 0
    %v208 = vsel %vm191, 1, 0
    %v209 = vsel %vm192, 1, 0
    %v210 = vsel %vm193, 1, 0
    %v211 = vsel %vm194, 1, 0
    %v212 = vsel %vm195, 1, 0
    %v213 = vsel %vm196, 1, 0
    %v214 = vsel %vm197, 1, 0
    %vm215 = vcmp.eq.s32.totalorder %v199, 1
    %vm216 = vcmp.eq.s32.totalorder %v200, 1
    %vm217 = vcmp.eq.s32.totalorder %v201, 1
    %vm218 = vcmp.eq.s32.totalorder %v202, 1
    %vm219 = vcmp.eq.s32.totalorder %v203, 1
    %vm220 = vcmp.eq.s32.totalorder %v204, 1
    %vm221 = vcmp.eq.s32.totalorder %v205, 1
    %vm222 = vcmp.eq.s32.totalorder %v206, 1
    %vm223 = vcmp.eq.s32.totalorder %v207, 1
    %vm224 = vcmp.eq.s32.totalorder %v208, 1
    %vm225 = vcmp.eq.s32.totalorder %v209, 1
    %vm226 = vcmp.eq.s32.totalorder %v210, 1
    %vm227 = vcmp.eq.s32.totalorder %v211, 1
    %vm228 = vcmp.eq.s32.totalorder %v212, 1
    %vm229 = vcmp.eq.s32.totalorder %v213, 1
    %vm230 = vcmp.eq.s32.totalorder %v214, 1
    %v231 = vlaneseq
    %v232 = vshrl.u32 %v231, 7
    %v233 = vsub.s32 0, %v232
    %v234 = vrot.slane %v198, %v233
    %v235 = vsel %vm215, %v234, %v166
    %v236 = vsel %vm216, %v234, %v167
    %v237 = vsel %vm217, %v234, %v168
    %v238 = vsel %vm218, %v234, %v169
    %v239 = vsel %vm219, %v234, %v170
    %v240 = vsel %vm220, %v234, %v171
    %v241 = vsel %vm221, %v234, %v172
    %v242 = vsel %vm222, %v234, %v173
    %v243 = vsel %vm223, %v234, %v174
    %v244 = vsel %vm224, %v234, %v175
    %v245 = vsel %vm225, %v234, %v176
    %v246 = vsel %vm226, %v234, %v177
    %v247 = vsel %vm227, %v234, %v178
    %v248 = vsel %vm228, %v234, %v179
    %v249 = vsel %vm229, %v234, %v180
    %v250 = vsel %vm230, %v234, %v181
    %vm251 = vcmp.eq.s32.totalorder %v47, 3
    %vm252 = vcmp.eq.s32.totalorder %v51, 3
    %vm253 = vcmp.eq.s32.totalorder %v55, 3
    %vm254 = vcmp.eq.s32.totalorder %v59, 3
    %vm255 = vcmp.eq.s32.totalorder %v63, 3
    %vm256 = vcmp.eq.s32.totalorder %v67, 3
    %vm257 = vcmp.eq.s32.totalorder %v71, 3
    %vm258 = vcmp.eq.s32.totalorder %v75, 3
    %vm259 = vcmp.eq.s32.totalorder %v79, 3
    %vm260 = vcmp.eq.s32.totalorder %v83, 3
    %vm261 = vcmp.eq.s32.totalorder %v87, 3
    %vm262 = vcmp.eq.s32.totalorder %v91, 3
    %vm263 = vcmp.eq.s32.totalorder %v95, 3
    %vm264 = vcmp.eq.s32.totalorder %v99, 3
    %vm265 = vcmp.eq.s32.totalorder %v103, 3
    %vm266 = vcmp.eq.s32.totalorder %v107, 3
    %v267 = vld [vmem:[#allocation5 + $0x3] sm:$0x1]
    %v268 = vsel %vm251, 1, 0
    %v269 = vsel %vm252, 1, 0
    %v270 = vsel %vm253, 1, 0
    %v271 = vsel %vm254, 1, 0
    %v272 = vsel %vm255, 1, 0
    %v273 = vsel %vm256, 1, 0
    %v274 = vsel %vm257, 1, 0
    %v275 = vsel %vm258, 1, 0
    %v276 = vsel %vm259, 1, 0
    %v277 = vsel %vm260, 1, 0
    %v278 = vsel %vm261, 1, 0
    %v279 = vsel %vm262, 1, 0
    %v280 = vsel %vm263, 1, 0
    %v281 = vsel %vm264, 1, 0
    %v282 = vsel %vm265, 1, 0
    %v283 = vsel %vm266, 1, 0
    %vm284 = vcmp.eq.s32.totalorder %v268, 1
    %vm285 = vcmp.eq.s32.totalorder %v269, 1
    %vm286 = vcmp.eq.s32.totalorder %v270, 1
    %vm287 = vcmp.eq.s32.totalorder %v271, 1
    %vm288 = vcmp.eq.s32.totalorder %v272, 1
    %vm289 = vcmp.eq.s32.totalorder %v273, 1
    %vm290 = vcmp.eq.s32.totalorder %v274, 1
    %vm291 = vcmp.eq.s32.totalorder %v275, 1
    %vm292 = vcmp.eq.s32.totalorder %v276, 1
    %vm293 = vcmp.eq.s32.totalorder %v277, 1
    %vm294 = vcmp.eq.s32.totalorder %v278, 1
    %vm295 = vcmp.eq.s32.totalorder %v279, 1
    %vm296 = vcmp.eq.s32.totalorder %v280, 1
    %vm297 = vcmp.eq.s32.totalorder %v281, 1
    %vm298 = vcmp.eq.s32.totalorder %v282, 1
    %vm299 = vcmp.eq.s32.totalorder %v283, 1
    %v300 = vlaneseq
    %v301 = vshrl.u32 %v300, 7
    %v302 = vsub.s32 0, %v301
    %v303 = vrot.slane %v267, %v302
    %v304 = vsel %vm284, %v303, %v235
    %v305 = vsel %vm285, %v303, %v236
    %v306 = vsel %vm286, %v303, %v237
    %v307 = vsel %vm287, %v303, %v238
    %v308 = vsel %vm288, %v303, %v239
    %v309 = vsel %vm289, %v303, %v240
    %v310 = vsel %vm290, %v303, %v241
    %v311 = vsel %vm291, %v303, %v242
    %v312 = vsel %vm292, %v303, %v243
    %v313 = vsel %vm293, %v303, %v244
    %v314 = vsel %vm294, %v303, %v245
    %v315 = vsel %vm295, %v303, %v246
    %v316 = vsel %vm296, %v303, %v247
    %v317 = vsel %vm297, %v303, %v248
    %v318 = vsel %vm298, %v303, %v249
    %v319 = vsel %vm299, %v303, %v250
    %320 = vst [vmem:[#allocation7] sm:$0xff] %v304
    %321 = vst [vmem:[#allocation7 + $0x8] sm:$0xff] %v305
    %322 = vst [vmem:[#allocation7 + $0x10] sm:$0xff] %v306
    %323 = vst [vmem:[#allocation7 + $0x18] sm:$0xff] %v307
    %324 = vst [vmem:[#allocation7 + $0x20] sm:$0xff] %v308
    %325 = vst [vmem:[#allocation7 + $0x28] sm:$0xff] %v309
    %326 = vst [vmem:[#allocation7 + $0x30] sm:$0xff] %v310
    %327 = vst [vmem:[#allocation7 + $0x38] sm:$0xff] %v311
    %328 = vst [vmem:[#allocation7 + $0x40] sm:$0xff] %v312
    %329 = vst [vmem:[#allocation7 + $0x48] sm:$0xff] %v313
    %330 = vst [vmem:[#allocation7 + $0x50] sm:$0xff] %v314
    %331 = vst [vmem:[#allocation7 + $0x58] sm:$0xff] %v315
    %332 = vst [vmem:[#allocation7 + $0x60] sm:$0xff] %v316
    %333 = vst [vmem:[#allocation7 + $0x68] sm:$0xff] %v317
    %334 = vst [vmem:[#allocation7 + $0x70] sm:$0xff] %v318
    %335 = vst [vmem:[#allocation7 + $0x78] sm:$0xff] %v319
    // Predicated region
    $region18: #{tpu_custom_call.1} parent=1 // pred_check
      _
    $region19: #{tpu_custom_call.1} parent=1 // pred_check_branch
      %337 = sbr.rel (0) target = $region21
    $region20: #{tpu_custom_call.1} parent=1 // pred_region
      %s339 = ssub.s32 2048, 2048
      %340 = vsyncadd [#allocation4], %s339
      %s341 = sshll.u32 [#allocation7], 4
      %s342 = int_to_ptr.vmem [resolvable:$true] %s341
      %347 = dma.vmem_to_hbm [thread:$0]  %s342, 2048, %s2, [#allocation4], 128, 128, 8
    $region21: #{tpu_custom_call.1} parent=1 // pred_fallthru
      _
    // Predicated region
    $region22: #{tpu_custom_call.1} parent=1 // pred_check
      _
    $region23: #{tpu_custom_call.1} parent=1 // pred_check_branch
      %349 = sbr.rel (0) target = $region25
    $region24: #{tpu_custom_call.1} parent=1 // pred_region
      %350 = dma.done [#allocation4], 2048
    $region25: #{tpu_custom_call.1} parent=1 // pred_fallthru
      _
    %351 = vsyncpa [#allocation3], 1
    %352 = vsyncpa [#allocation6], 1
    %353 = vsyncpa [#allocation4], 1

</llo_original>
